<compile_context>
chip_gen: v7x
topology: tpu7x:2x2x1
jax: 0.10.0
libtpu: 0.0.40
codegen_flags: <defaults>
</compile_context>

<pallas_src>
import functools

import jax
import jax.numpy as jnp
from jax.experimental import pallas as pl
from jax.experimental.pallas import tpu as pltpu

MIB = 1024 * 1024


def _round_up(v: int, m: int) -> int:
    return -(-v // m) * m


def _vmem_capacity_bytes() -> int:
    """Physical VMEM of the local TPU generation; conservative default if unknown."""
    try:
        info_fn = getattr(pltpu, "get_tpu_info", None)
        if info_fn is not None:
            return int(info_fn().vmem_capacity_bytes)
    except Exception:
        pass
    return 64 * MIB  # v7x per-TensorCore capacity (smallest current part)


def _block_vmem_bytes(batch: int, tile_k: int, tile_fout: int, has_dropout: bool) -> int:
    """Approximate double-buffered VMEM footprint of one grid step."""
    x_b = 2 * batch * tile_k * 2            # bf16, double buffered
    w_b = 2 * tile_k * tile_fout * 2        # bf16, double buffered
    sgb_b = 2 * 3 * tile_fout * 4
    u_b = 2 * batch * tile_fout * 4 if has_dropout else 0
    o_b = 2 * batch * tile_fout * 4
    acc_b = batch * tile_fout * 4
    return x_b + w_b + sgb_b + u_b + o_b + acc_b


def _choose_tile_fout(fout_pad: int) -> int:
    # Lane-dense (multiple of 128) tiles; prefer >= 2 tiles along the "parallel"
    # axis so both v7x TensorCores get work when F_out allows it.
    divisors = [c for c in (512, 384, 256, 128) if fout_pad % c == 0]
    for cand in divisors:
        if fout_pad // cand >= 2:
            return cand
    return divisors[0] if divisors else 128


def _choose_tile_k(fin_pad: int, tile_fout: int, batch: int, has_dropout: bool,
                   budget_bytes: int) -> int:
    # Largest multiple of 128 that divides fin_pad and fits the VMEM budget.
    if _block_vmem_bytes(batch, fin_pad, tile_fout, has_dropout) <= budget_bytes:
        return fin_pad                      # whole-K: single reduction step
    best = 128
    cand = 128
    while cand < fin_pad:
        if (fin_pad % cand == 0 and
                _block_vmem_bytes(batch, cand, tile_fout, has_dropout) <= budget_bytes):
            best = cand
        cand += 128
    return best


def _fc_unit_kernel(*refs, dropout_rate: float, eps: float, negative_slope: float,
                    num_k: int):
    has_dropout = dropout_rate > 0.0
    it = list(refs)
    x_ref = it.pop(0)                                   # (B, tile_k)        bf16
    w_ref = it.pop(0)                                   # (tile_k, tile_fout) bf16
    sgb_ref = it.pop(0)                                 # (3, tile_fout)     f32: bias/gamma/beta
    u_ref = it.pop(0) if has_dropout else None          # (B, tile_fout)     f32 uniforms
    o_ref = it.pop(0)                                   # (B, tile_fout)     f32
    acc_ref = it.pop(0) if num_k > 1 else None          # (B, tile_fout)     f32 scratch

    # MXU: bf16 operands (cast once in the wrapper), f32 accumulation, no RHS transpose.
    partial = jnp.dot(x_ref[...], w_ref[...], preferred_element_type=jnp.float32)

    if num_k > 1:
        # program_id is read only at the top level of the kernel body (never inside a
        # pl.when body) so it lowers both on Mosaic and under the interpret fallback.
        k = pl.program_id(1)

        @pl.when(k == 0)
        def _first():
            acc_ref[...] = partial          # direct write, not zero-init + add

        @pl.when(k > 0)
        def _accumulate():
            acc_ref[...] += partial

    def _epilogue():
        acc = acc_ref[...] if num_k > 1 else partial
        bias = sgb_ref[0:1, :]
        gamma = sgb_ref[1:2, :]
        beta = sgb_ref[2:3, :]

        y = acc + bias                                               # Linear bias
        y = jnp.where(y > 0, y, jnp.float32(negative_slope) * y)     # LeakyReLU (0.01)

        # BatchNorm1d training mode: biased batch stats, centered sum of squares.
        inv_n = jnp.float32(1.0 / y.shape[0])
        mean = jnp.sum(y, axis=0, keepdims=True) * inv_n
        d = y - mean
        var = jnp.sum(d * d, axis=0, keepdims=True) * inv_n
        scale = gamma * jax.lax.rsqrt(var + jnp.float32(eps))
        shift = beta

        if has_dropout:
            # Fold the dropout 1/(1-p) rescale into the BN affine (fewer ops/element).
            inv_keep = jnp.float32(1.0 / (1.0 - dropout_rate))
            scale = scale * inv_keep
            shift = shift * inv_keep
            keep = u_ref[...] >= jnp.float32(dropout_rate)
            out = jnp.where(keep, d * scale + shift, 0.0)
        else:
            out = d * scale + shift
        o_ref[...] = out.astype(o_ref.dtype)

    if num_k > 1:
        pl.when(k == num_k - 1)(_epilogue)
    else:
        _epilogue()


def prepare_fc_unit_params(w, b, gamma, beta, *, mxu_dtype=jnp.bfloat16):
    """One-time parameter preprocessing: pad, transpose to (F_in, F_out), cast to bf16.

    Runs once per parameter set (not per forward call), so the per-call path pays no
    extra HBM pass on the weight.
    """
    fout, fin = w.shape
    fout_pad = _round_up(fout, 128)
    fin_pad = _round_up(fin, 128)
    tile_fout = _choose_tile_fout(fout_pad)

    wt = jnp.transpose(w)                                           # (F_in, F_out)
    wt = jnp.pad(wt, ((0, fin_pad - fin), (0, fout_pad - fout))).astype(mxu_dtype)

    def _padf(v):
        return jnp.pad(v.astype(jnp.float32), (0, fout_pad - fout))

    sgb = jnp.stack([_padf(b), _padf(gamma), _padf(beta)], axis=0)  # (3, fout_pad)

    return dict(wt=wt, sgb=sgb, fin=fin, fout=fout, fin_pad=fin_pad,
                fout_pad=fout_pad, tile_fout=tile_fout, mxu_dtype=mxu_dtype)


def fc_unit_forward(x, params, *, dropout_rate, rng_key=None,
                    eps=1e-5, negative_slope=0.01):
    """FCUnit forward (PyTorch training-mode semantics).

    x: (B, F_in) float32; params: output of prepare_fc_unit_params.
    """
    assert 0.0 <= float(dropout_rate) < 1.0
    B, fin = x.shape
    assert fin == params["fin"]
    fin_pad, fout_pad = params["fin_pad"], params["fout_pad"]
    tile_fout = params["tile_fout"]
    has_dropout = float(dropout_rate) > 0.0

    # ---- generation- and batch-aware tile & VMEM plan ------------------------------
    vmem_cap = _vmem_capacity_bytes()                    # 64 MiB v7x, 128 MiB v5e/v6e
    vmem_limit = min((3 * vmem_cap) // 4, 100 * MIB)
    budget = (4 * vmem_limit) // 5
    tile_k = _choose_tile_k(fin_pad, tile_fout, B, has_dropout, budget)
    vmem_limit = min(vmem_cap, max(vmem_limit,
                                   _block_vmem_bytes(B, tile_k, tile_fout, has_dropout) + 8 * MIB))
    num_k = fin_pad // tile_k

    # ---- per-call input prep (x only; parameters were prepared once) ---------------
    if fin_pad != fin:
        x = jnp.pad(x, ((0, 0), (0, fin_pad - fin)))
    x = x.astype(params["mxu_dtype"])

    inputs = [x, params["wt"], params["sgb"]]
    in_specs = [
        pl.BlockSpec((B, tile_k), lambda i, k: (0, k)),              # x
        pl.BlockSpec((tile_k, tile_fout), lambda i, k: (k, i)),      # w (F_in, F_out)
        pl.BlockSpec((3, tile_fout), lambda i, k: (0, i)),           # bias/gamma/beta
    ]
    if has_dropout:
        if rng_key is None:
            rng_key = jax.random.PRNGKey(0)
        u = jax.random.uniform(rng_key, (B, fout_pad), dtype=jnp.float32)
        inputs.append(u)
        in_specs.append(pl.BlockSpec((B, tile_fout), lambda i, k: (0, i)))

    scratch_shapes = []
    if num_k > 1:
        scratch_shapes.append(pltpu.VMEM((B, tile_fout), jnp.float32))

    kernel = functools.partial(
        _fc_unit_kernel,
        dropout_rate=float(dropout_rate),
        eps=float(eps),
        negative_slope=float(negative_slope),
        num_k=num_k,
    )

    grid_spec = pltpu.PrefetchScalarGridSpec(
        num_scalar_prefetch=0,
        grid=(fout_pad // tile_fout, num_k),
        in_specs=in_specs,
        out_specs=pl.BlockSpec((B, tile_fout), lambda i, k: (0, i)),
        scratch_shapes=scratch_shapes,
    )

    bytes_accessed = (2 * (B * fin_pad + fin_pad * fout_pad)         # bf16 x, w
                      + 4 * (B * fout_pad + 3 * fout_pad)            # f32 out + params
                      + (4 * B * fout_pad if has_dropout else 0))    # f32 uniforms

    out = pl.pallas_call(
        kernel,
        out_shape=jax.ShapeDtypeStruct((B, fout_pad), jnp.float32),
        grid_spec=grid_spec,
        compiler_params=pltpu.CompilerParams(
            # F_out tiles are independent -> shard across v7x's two TensorCores;
            # K is a reduction into the accumulator -> "arbitrary".
            dimension_semantics=("parallel", "arbitrary"),
            vmem_limit_bytes=int(vmem_limit),
        ),
        cost_estimate=pl.CostEstimate(
            flops=2 * B * fin_pad * fout_pad,
            transcendentals=fout_pad,                 # rsqrt per output feature
            bytes_accessed=bytes_accessed,
        ),
    )(*inputs)

    return out[:, :params["fout"]]


if __name__ == "__main__":
    # Small shapes consistent with FCUnit(input_size, output_size, dropout_rate)
    B, INPUT_SIZE, OUTPUT_SIZE = 8, 64, 32
    DROPOUT_RATE = 0.1

    key = jax.random.PRNGKey(0)
    kx, kw, kb, kd = jax.random.split(key, 4)

    x = jax.random.normal(kx, (B, INPUT_SIZE), dtype=jnp.float32)

    # Deterministic parameter init (matching nn.Linear's U(-1/sqrt(fan_in), 1/sqrt(fan_in)))
    bound = 1.0 / (INPUT_SIZE ** 0.5)
    w = jax.random.uniform(kw, (OUTPUT_SIZE, INPUT_SIZE), jnp.float32, -bound, bound)
    b = jax.random.uniform(kb, (OUTPUT_SIZE,), jnp.float32, -bound, bound)
    gamma = jnp.ones((OUTPUT_SIZE,), jnp.float32)   # BatchNorm1d weight init
    beta = jnp.zeros((OUTPUT_SIZE,), jnp.float32)   # BatchNorm1d bias init

    params = prepare_fc_unit_params(w, b, gamma, beta)   # one-time pad/transpose/cast
    out = fc_unit_forward(x, params, dropout_rate=DROPOUT_RATE, rng_key=kd)
    out = jax.block_until_ready(out)

    assert out.shape == (B, OUTPUT_SIZE)
    assert bool(jnp.all(jnp.isfinite(out)))
    print("KERNEL_OK")
</pallas_src>

<mosaic_0001>
module attributes {stable_mosaic.version = 11 : i64} {
  func.func @_fc_unit_kernel(%arg0: i32, %arg1: i32, %arg2: memref<8x128xbf16, #tpu.memory_space<vmem>>, %arg3: memref<128x128xbf16, #tpu.memory_space<vmem>>, %arg4: memref<3x128xf32, #tpu.memory_space<vmem>>, %arg5: memref<8x128xf32, #tpu.memory_space<vmem>>, %arg6: memref<8x128xf32, #tpu.memory_space<vmem>>) attributes {dimension_semantics = [#tpu.dimension_semantics<parallel>, #tpu.dimension_semantics<arbitrary>], iteration_bounds = array<i64: 1, 1>, scalar_prefetch = 0 : i64, scratch_operands = 0 : i64, tpu.core_type = #tpu.core_type<tc>, window_params = [{transform_indices = @transform_0, window_bounds = array<i64: 8, 128>}, {transform_indices = @transform_1, window_bounds = array<i64: 128, 128>}, {transform_indices = @transform_2, window_bounds = array<i64: 3, 128>}, {transform_indices = @transform_3, window_bounds = array<i64: 8, 128>}, {transform_indices = @transform_4, window_bounds = array<i64: 8, 128>}]} {
    %c0 = arith.constant 0 : index
    %c0_0 = arith.constant 0 : index
    %0 = vector.load %arg2[%c0, %c0_0] : memref<8x128xbf16, #tpu.memory_space<vmem>>, vector<8x128xbf16>
    %c0_1 = arith.constant 0 : index
    %c0_2 = arith.constant 0 : index
    %1 = vector.load %arg3[%c0_1, %c0_2] : memref<128x128xbf16, #tpu.memory_space<vmem>>, vector<128x128xbf16>
    %cst = arith.constant dense<0.000000e+00> : vector<8x128xf32>
    %2 = tpu.matmul %0, %1, %cst {dimension_numbers = #tpu.dot_dimension_numbers<[1], [0], [0], [1], [0, 0, 1, 1], [], []>} : vector<8x128xbf16>, vector<128x128xbf16>, vector<8x128xf32> -> vector<8x128xf32>
    %c0_3 = arith.constant 0 : index
    %c0_4 = arith.constant 0 : index
    %3 = vector.load %arg4[%c0_3, %c0_4] : memref<3x128xf32, #tpu.memory_space<vmem>>, vector<1x128xf32>
    %c1 = arith.constant 1 : index
    %c0_5 = arith.constant 0 : index
    %4 = vector.load %arg4[%c1, %c0_5] : memref<3x128xf32, #tpu.memory_space<vmem>>, vector<1x128xf32>
    %c2 = arith.constant 2 : index
    %c0_6 = arith.constant 0 : index
    %5 = vector.load %arg4[%c2, %c0_6] : memref<3x128xf32, #tpu.memory_space<vmem>>, vector<1x128xf32>
    %6 = vector.broadcast %3 : vector<1x128xf32> to vector<8x128xf32>
    %7 = arith.addf %2, %6 : vector<8x128xf32>
    %cst_7 = arith.constant 0.000000e+00 : f32
    %8 = vector.broadcast %cst_7 : f32 to vector<8x128xf32>
    %9 = arith.cmpf ogt, %7, %8 : vector<8x128xf32>
    %cst_8 = arith.constant 0.00999999977 : f32
    %10 = vector.broadcast %cst_8 : f32 to vector<8x128xf32>
    %11 = arith.mulf %10, %7 : vector<8x128xf32>
    %12 = arith.select %9, %7, %11 : vector<8x128xi1>, vector<8x128xf32>
    %cst_9 = arith.constant dense<0.000000e+00> : vector<128xf32>
    %13 = vector.multi_reduction <add>, %12, %cst_9 [0] : vector<8x128xf32> to vector<128xf32>
    %14 = vector.shape_cast %13 : vector<128xf32> to vector<1x128xf32>
    %cst_10 = arith.constant 1.250000e-01 : f32
    %15 = vector.broadcast %cst_10 : f32 to vector<1x128xf32>
    %16 = arith.mulf %14, %15 : vector<1x128xf32>
    %17 = vector.broadcast %16 : vector<1x128xf32> to vector<8x128xf32>
    %18 = arith.subf %12, %17 : vector<8x128xf32>
    %19 = arith.mulf %18, %18 : vector<8x128xf32>
    %cst_11 = arith.constant dense<0.000000e+00> : vector<128xf32>
    %20 = vector.multi_reduction <add>, %19, %cst_11 [0] : vector<8x128xf32> to vector<128xf32>
    %21 = vector.shape_cast %20 : vector<128xf32> to vector<1x128xf32>
    %cst_12 = arith.constant 1.250000e-01 : f32
    %22 = vector.broadcast %cst_12 : f32 to vector<1x128xf32>
    %23 = arith.mulf %21, %22 : vector<1x128xf32>
    %cst_13 = arith.constant 9.99999974E-6 : f32
    %24 = vector.broadcast %cst_13 : f32 to vector<1x128xf32>
    %25 = arith.addf %23, %24 : vector<1x128xf32>
    %26 = math.rsqrt %25 : vector<1x128xf32>
    %27 = arith.mulf %4, %26 : vector<1x128xf32>
    %cst_14 = arith.constant 1.11111116 : f32
    %28 = vector.broadcast %cst_14 : f32 to vector<1x128xf32>
    %29 = arith.mulf %27, %28 : vector<1x128xf32>
    %cst_15 = arith.constant 1.11111116 : f32
    %30 = vector.broadcast %cst_15 : f32 to vector<1x128xf32>
    %31 = arith.mulf %5, %30 : vector<1x128xf32>
    %c0_16 = arith.constant 0 : index
    %c0_17 = arith.constant 0 : index
    %32 = vector.load %arg5[%c0_16, %c0_17] : memref<8x128xf32, #tpu.memory_space<vmem>>, vector<8x128xf32>
    %cst_18 = arith.constant 1.000000e-01 : f32
    %33 = vector.broadcast %cst_18 : f32 to vector<8x128xf32>
    %34 = arith.cmpf oge, %32, %33 : vector<8x128xf32>
    %35 = vector.broadcast %29 : vector<1x128xf32> to vector<8x128xf32>
    %36 = arith.mulf %18, %35 : vector<8x128xf32>
    %37 = vector.broadcast %31 : vector<1x128xf32> to vector<8x128xf32>
    %38 = arith.addf %36, %37 : vector<8x128xf32>
    %cst_19 = arith.constant 0.000000e+00 : f32
    %39 = vector.broadcast %cst_19 : f32 to vector<8x128xf32>
    %40 = arith.select %34, %38, %39 : vector<8x128xi1>, vector<8x128xf32>
    %c0_20 = arith.constant 0 : index
    %c0_21 = arith.constant 0 : index
    %41 = vector.load %arg6[%c0_20, %c0_21] : memref<8x128xf32, #tpu.memory_space<vmem>>, vector<8x128xf32>
    tpu.vector_store %arg6[%c0_20, %c0_21], %40 {strides = array<i32>} : memref<8x128xf32, #tpu.memory_space<vmem>>, vector<8x128xf32>,
    return
  }
  func.func @transform_0(%arg0: i32, %arg1: i32) -> (i32, i32) {
    %c0_i32 = arith.constant 0 : i32
    %c0_i32_0 = arith.constant 0 : i32
    return %c0_i32, %arg1 : i32, i32
  }
  func.func @transform_1(%arg0: i32, %arg1: i32) -> (i32, i32) {
    %c0_i32 = arith.constant 0 : i32
    return %arg1, %arg0 : i32, i32
  }
  func.func @transform_2(%arg0: i32, %arg1: i32) -> (i32, i32) {
    %c0_i32 = arith.constant 0 : i32
    %c0_i32_0 = arith.constant 0 : i32
    return %c0_i32, %arg0 : i32, i32
  }
  func.func @transform_3(%arg0: i32, %arg1: i32) -> (i32, i32) {
    %c0_i32 = arith.constant 0 : i32
    %c0_i32_0 = arith.constant 0 : i32
    return %c0_i32, %arg0 : i32, i32
  }
  func.func @transform_4(%arg0: i32, %arg1: i32) -> (i32, i32) {
    %c0_i32 = arith.constant 0 : i32
    %c0_i32_0 = arith.constant 0 : i32
    return %c0_i32, %arg0 : i32, i32
  }
}

</mosaic_0001>

<llo_original>
// kernel: tpu_custom_call.1
$region0: #{tpu_custom_call.1}
  #allocation0 [shape = 'u32[]', space=smem, size = 0x4, offset = 0x4, fixed_abs, tag = 'smem constant byte address 0x4 - core index']
  #allocation1 [shape = 'u32[144,128]{1,0:T(1,128)}', space=vmem, size = 0x12000, scoped, tag = 'internal scratch']
  %s0 = inlined_call_operand.hbm [shape: bf16[8,128], index: 0, kind: input, shape index: {}]
  %s1 = inlined_call_operand.hbm [shape: bf16[128,128], index: 1, kind: input, shape index: {}]
  %s2 = inlined_call_operand.hbm [shape: f32[3,128], index: 2, kind: input, shape index: {}]
  %s3 = inlined_call_operand.vmem [shape: f32[8,128], index: 3, kind: input, shape index: {}]
  %s4 = inlined_call_operand.hbm [shape: f32[8,128], index: 4, kind: output, shape index: {}]
  %s5 = sld [smem:[#allocation0]]
  $region38: #{tpu_custom_call.1} parent=0
    _
  %s7 = ssub.s32 1, %s5
  %s8 = scalar_select 0, %s7, %s5
  $region1: #{tpu_custom_call.1} parent=0
    #allocation2 [shape = 'u8[2048]{0}', space=vmem, size = 0x800, scoped, tag = 'input window, operand 0, single buffered']
    #allocation3 [shape = 's32[1]{0}', space=sflag, size = 0x4, scoped, tag = 'scoped memory for tpu_custom_call.1']
    #allocation4 [shape = 's32[1]{0}', space=sflag, size = 0x4, scoped, tag = 'scoped memory for tpu_custom_call.1']
    #allocation5 [shape = 'u8[32768]{0}', space=vmem, size = 0x8000, scoped, tag = 'input window, operand 1, single buffered']
    #allocation6 [shape = 's32[1]{0}', space=sflag, size = 0x4, scoped, tag = 'scoped memory for tpu_custom_call.1']
    #allocation7 [shape = 'u8[2048]{0}', space=vmem, size = 0x800, scoped, tag = 'input window, operand 2, single buffered']
    #allocation8 [shape = 'u8[4096]{0}', space=vmem, size = 0x1000, scoped, tag = 'output window, operand 0, single buffered']
    %9 = vsyncpa [#allocation3], 0
    %10 = vsyncpa [#allocation6], 0
    %11 = vsyncpa [#allocation4], 0
    // Predicated region
    $region2: #{tpu_custom_call.1} parent=1 // pred_check
      _
    $region3: #{tpu_custom_call.1} parent=1 // pred_check_branch
      %13 = sbr.rel (0) target = $region5
    $region4: #{tpu_custom_call.1} parent=1 // pred_region
      %s15 = ssub.s32 64, 64
      %16 = vsyncadd [#allocation3], %s15
      %s18 = sshll.u32 [#allocation2], 4
      %s19 = int_to_ptr.vmem [resolvable:$true] %s18
      %21 = dma.hbm_to_vmem [thread:$0]  %s0, 64, %s19, [#allocation3]
    $region5: #{tpu_custom_call.1} parent=1 // pred_fallthru
      _
    // Predicated region
    $region6: #{tpu_custom_call.1} parent=1 // pred_check
      _
    $region7: #{tpu_custom_call.1} parent=1 // pred_check_branch
      %23 = sbr.rel (0) target = $region9
    $region8: #{tpu_custom_call.1} parent=1 // pred_region
      %s25 = ssub.s32 1024, 1024
      %26 = vsyncadd [#allocation6], %s25
      %s27 = sshll.u32 [#allocation5], 4
      %s28 = int_to_ptr.vmem [resolvable:$true] %s27
      %33 = dma.hbm_to_vmem [thread:$0]  %s1, 1024, %s28, [#allocation6], 64, 64, 4
    $region9: #{tpu_custom_call.1} parent=1 // pred_fallthru
      _
    // Predicated region
    $region10: #{tpu_custom_call.1} parent=1 // pred_check
      _
    $region11: #{tpu_custom_call.1} parent=1 // pred_check_branch
      %35 = sbr.rel (0) target = $region13
    $region12: #{tpu_custom_call.1} parent=1 // pred_region
      %s37 = ssub.s32 64, 64
      %38 = vsyncadd [#allocation6], %s37
      %s40 = sshll.u32 [#allocation7], 4
      %s41 = int_to_ptr.vmem [resolvable:$true] %s40
      %43 = dma.hbm_to_vmem [thread:$0]  %s2, 64, %s41, [#allocation6]
    $region13: #{tpu_custom_call.1} parent=1 // pred_fallthru
      _
    // Predicated region
    $region14: #{tpu_custom_call.1} parent=1 // pred_check
      _
    $region15: #{tpu_custom_call.1} parent=1 // pred_check_branch
      %45 = sbr.rel (0) target = $region17
    $region16: #{tpu_custom_call.1} parent=1 // pred_region
      _
    $region17: #{tpu_custom_call.1} parent=1 // pred_fallthru
      _
    // Predicated region
    $region18: #{tpu_custom_call.1} parent=1 // pred_check
      _
    $region19: #{tpu_custom_call.1} parent=1 // pred_check_branch
      %47 = sbr.rel (0) target = $region21
    $region20: #{tpu_custom_call.1} parent=1 // pred_region
      %48 = dma.done [#allocation3], 64
    $region21: #{tpu_custom_call.1} parent=1 // pred_fallthru
      _
    // Predicated region
    $region22: #{tpu_custom_call.1} parent=1 // pred_check
      _
    $region23: #{tpu_custom_call.1} parent=1 // pred_check_branch
      %50 = sbr.rel (0) target = $region25
    $region24: #{tpu_custom_call.1} parent=1 // pred_region
      %51 = dma.done [#allocation6], 1024
    $region25: #{tpu_custom_call.1} parent=1 // pred_fallthru
      _
    // Predicated region
    $region26: #{tpu_custom_call.1} parent=1 // pred_check
      _
    $region27: #{tpu_custom_call.1} parent=1 // pred_check_branch
      %53 = sbr.rel (0) target = $region29
    $region28: #{tpu_custom_call.1} parent=1 // pred_region
      %54 = dma.done [#allocation6], 64
    $region29: #{tpu_custom_call.1} parent=1 // pred_fallthru
      _
    %v56 = vld [vmem:[#allocation2] sm:$0xf]
    %v57 = vld [vmem:[#allocation5] sm:$0xf]
    %v58 = vld [vmem:[#allocation5 + $0x4] sm:$0xf]
    %v59 = vld [vmem:[#allocation5 + $0x8] sm:$0xf]
    %v60 = vld [vmem:[#allocation5 + $0xc] sm:$0xf]
    %v61 = vld [vmem:[#allocation5 + $0x10] sm:$0xf]
    %v62 = vld [vmem:[#allocation5 + $0x14] sm:$0xf]
    %v63 = vld [vmem:[#allocation5 + $0x18] sm:$0xf]
    %v64 = vld [vmem:[#allocation5 + $0x1c] sm:$0xf]
    %v65 = vld [vmem:[#allocation5 + $0x20] sm:$0xf]
    %v66 = vld [vmem:[#allocation5 + $0x24] sm:$0xf]
    %v67 = vld [vmem:[#allocation5 + $0x28] sm:$0xf]
    %v68 = vld [vmem:[#allocation5 + $0x2c] sm:$0xf]
    %v69 = vld [vmem:[#allocation5 + $0x30] sm:$0xf]
    %v70 = vld [vmem:[#allocation5 + $0x34] sm:$0xf]
    %v71 = vld [vmem:[#allocation5 + $0x38] sm:$0xf]
    %v72 = vld [vmem:[#allocation5 + $0x3c] sm:$0xf]
    %v73 = vld [vmem:[#allocation7] sm:$0x1]
    %v74 = vld [vmem:[#allocation7 + $0x1] sm:$0x1]
    %v75 = vld [vmem:[#allocation7 + $0x2] sm:$0x1]
    %v76 = vlaneseq
    %v77 = vshrl.u32 %v76, 7
    %v78 = vsub.s32 0, %v77
    %v79 = vrot.slane %v73, %v78
    %v96 = vunpack.c.l.b16 %v57
    %v97 = vunpack.c.l.b16 %v58
    %v98 = vunpack.c.l.b16 %v59
    %v99 = vunpack.c.l.b16 %v60
    %v100 = vunpack.c.l.b16 %v61
    %v101 = vunpack.c.l.b16 %v62
    %v102 = vunpack.c.l.b16 %v63
    %v103 = vunpack.c.l.b16 %v64
    %v104 = vunpack.c.l.b16 %v65
    %v105 = vunpack.c.l.b16 %v66
    %v106 = vunpack.c.l.b16 %v67
    %v107 = vunpack.c.l.b16 %v68
    %v108 = vunpack.c.l.b16 %v69
    %v109 = vunpack.c.l.b16 %v70
    %v110 = vunpack.c.l.b16 %v71
    %v111 = vunpack.c.l.b16 %v72
    %v112 = vpack.c.b16 %v97, %v96
    %v113 = vpack.c.b16 %v99, %v98
    %v114 = vpack.c.b16 %v101, %v100
    %v115 = vpack.c.b16 %v103, %v102
    %v116 = vpack.c.b16 %v105, %v104
    %v117 = vpack.c.b16 %v107, %v106
    %v118 = vpack.c.b16 %v109, %v108
    %v119 = vpack.c.b16 %v111, %v110
    %128 = vmatprep.subr.bf16.mxu0 0
    %129 = vmatpush1.bf16.msra.mxu0 %v112
    %130 = vmatprep.subr.bf16.mxu0 0
    %131 = vmatpush1.bf16.msra.mxu0 %v113
    %132 = vmatprep.subr.bf16.mxu0 0
    %133 = vmatpush1.bf16.msra.mxu0 %v114
    %134 = vmatprep.subr.bf16.mxu0 0
    %135 = vmatpush1.bf16.msra.mxu0 %v115
    %136 = vmatprep.subr.bf16.mxu0 0
    %137 = vmatpush1.bf16.msra.mxu0 %v116
    %138 = vmatprep.subr.bf16.mxu0 0
    %139 = vmatpush1.bf16.msra.mxu0 %v117
    %140 = vmatprep.subr.bf16.mxu0 0
    %141 = vmatpush1.bf16.msra.mxu0 %v118
    %142 = vmatprep.subr.bf16.mxu0 0
    %143 = vmatpush1.bf16.msra.mxu0 %v119
    %144 = vmatprep.subr.bf16.mxu0 0
    %145 = vmatpush1.bf16.msra.mxu0 0
    %146 = vmatprep.subr.bf16.mxu0 0
    %147 = vmatpush1.bf16.msra.mxu0 0
    %148 = vmatprep.subr.bf16.mxu0 0
    %149 = vmatpush1.bf16.msra.mxu0 0
    %150 = vmatprep.subr.bf16.mxu0 0
    %151 = vmatpush1.bf16.msra.mxu0 0
    %152 = vmatprep.subr.bf16.mxu0 0
    %153 = vmatpush1.bf16.msra.mxu0 0
    %154 = vmatprep.subr.bf16.mxu0 0
    %155 = vmatpush1.bf16.msra.mxu0 0
    %156 = vmatprep.subr.bf16.mxu0 0
    %157 = vmatpush1.bf16.msra.mxu0 0
    %158 = vmatprep.subr.bf16.mxu0 0
    %159 = vmatpush1.bf16.msra.mxu0 0
    %160 = vmatprep.mubr.bf16.mxu0 0
    %161 = vmatmul.mubr.bf16.gmra.mrb[0].mxu0 %v56
    %v162 = vpop.f32.mrb[0].mxu0
    %v163 = vadd.f32 %v79, %v162
    %v164 = vpop.f32.mrb[0].mxu0
    %v165 = vpop.f32.mrb[0].mxu0
    %v166 = vpop.f32.mrb[0].mxu0
    %167 = vdwg.mxu0
    %vm168 = vcmp.gt.f32.partialorder %v163, 0.0
    %v169 = vmul.f32 %v163, 0.01
    %v170 = vsel %vm168, %v163, %v169
    %v171 = vrot.slane %v170, 4
    %v172 = vadd.f32 %v170, %v171
    %v173 = vrot.slane %v172, 2
    %v174 = vadd.f32 %v172, %v173
    %v175 = vrot.slane %v174, 1
    %v176 = vadd.f32 %v174, %v175
    %v177 = vmul.f32 %v176, 0.125
    %v178 = vsub.f32 %v170, %v177
    %v179 = vmul.f32 %v178, %v178
    %v180 = vrot.slane %v179, 4
    %v181 = vadd.f32 %v179, %v180
    %v182 = vrot.slane %v181, 2
    %v183 = vadd.f32 %v181, %v182
    %v184 = vrot.slane %v183, 1
    %v185 = vadd.f32 %v183, %v184
    %v186 = vmul.f32 %v185, 0.125
    %v187 = vadd.f32 %v186, 1e-05
    %v188 = vrsqrt.pop %v187
    %v189 = vmul.f32 %v74, %v188
    %v190 = vmul.f32 %v189, 1.1111112
    %v191 = vmul.f32 %v75, 1.1111112
    %v192 = vld [vmem:[%s3] sm:$0xff]
    %vm193 = vcmp.ge.f32.partialorder %v192, 0.1
    %v194 = vlaneseq
    %v195 = vshrl.u32 %v194, 7
    %v196 = vsub.s32 0, %v195
    %v197 = vrot.slane %v190, %v196
    %v198 = vmul.f32 %v178, %v197
    %v199 = vlaneseq
    %v200 = vshrl.u32 %v199, 7
    %v201 = vsub.s32 0, %v200
    %v202 = vrot.slane %v191, %v201
    %v203 = vadd.f32 %v198, %v202
    %v204 = vsel %vm193, %v203, 0.0
    %205 = vst [vmem:[#allocation8] sm:$0xff] %v204
    // Predicated region
    $region30: #{tpu_custom_call.1} parent=1 // pred_check
      _
    $region31: #{tpu_custom_call.1} parent=1 // pred_check_branch
      %207 = sbr.rel (0) target = $region33
    $region32: #{tpu_custom_call.1} parent=1 // pred_region
      %s209 = ssub.s32 128, 128
      %210 = vsyncadd [#allocation4], %s209
      %s212 = sshll.u32 [#allocation8], 4
      %s213 = int_to_ptr.vmem [resolvable:$true] %s212
      %215 = dma.vmem_to_hbm [thread:$0]  %s213, 128, %s4, [#allocation4]
    $region33: #{tpu_custom_call.1} parent=1 // pred_fallthru
      _
    // Predicated region
    $region34: #{tpu_custom_call.1} parent=1 // pred_check
      _
    $region35: #{tpu_custom_call.1} parent=1 // pred_check_branch
      %217 = sbr.rel (0) target = $region37
    $region36: #{tpu_custom_call.1} parent=1 // pred_region
      %218 = dma.done [#allocation4], 128
    $region37: #{tpu_custom_call.1} parent=1 // pred_fallthru
      _
    %219 = vsyncpa [#allocation3], 1
    %220 = vsyncpa [#allocation6], 1
    %221 = vsyncpa [#allocation4], 1

</llo_original>
